<compile_context>
chip_gen: v7x
topology: tpu7x:2x2x1
jax: 0.10.0
libtpu: 0.0.40
codegen_flags: <defaults>
</compile_context>

<pallas_src>
import functools

import jax
import jax.numpy as jnp
from jax.experimental import pallas as pl
from jax.experimental.pallas import tpu as pltpu

LANES = 128  # vreg lane width


def linear_kernel(x_ref, wb_ref, o_ref):
    # x_ref / o_ref: (tile_r, 128) f32 tile in VMEM
    # wb_ref: (2,) f32 in SMEM -> [weight, bias]
    w = wb_ref[0]
    b = wb_ref[1]
    o_ref[...] = (x_ref[...] * w + b).astype(o_ref.dtype)  # single VPU FMA, lane-dense


def _pick_tile_rows(rows, tile_rows_cap):
    """Sublane-aligned tile height.

    - rows <= 8: one full-array block (block_shape == array dims satisfies the
      (8, 128) rule).
    - otherwise: multiple of 8, capped by tile_rows_cap, and also capped near
      rows/2 so the grid has >= 2 steps (v7x megacore sharding).
    """
    if rows <= 8:
        return rows
    half = 8 * pl.cdiv(pl.cdiv(rows, 2), 8)
    return max(8, min(tile_rows_cap, half))


@functools.partial(jax.jit, static_argnames=("tile_rows",))
def linear_forward(x, weight, bias, *, tile_rows=2048):
    """x: (N, 1) f32, weight: (1, 1) f32, bias: (1,) f32 -> (N, 1) f32."""
    n, in_features = x.shape
    assert in_features == 1, "Model is nn.Linear(1, 1)"
    assert x.dtype == jnp.float32, "kernel tiling assumes float32 input"

    # Pack the two scalars into a single SMEM operand.
    wb = jnp.concatenate([weight.reshape(1), bias.reshape(1)]).astype(jnp.float32)

    flat = x.reshape(-1)
    total = flat.shape[0]
    pad = (-total) % LANES          # static
    padded = pad != 0               # static

    if padded:
        # Ragged tail: pad only up to the next lane multiple (< 128 elements).
        flat = jnp.pad(flat, (0, pad))
    rows = (total + pad) // LANES
    x2d = flat.reshape(rows, LANES)  # lane-dense slab; a pure bitcast when not padded

    tile_r = _pick_tile_rows(rows, tile_rows)
    grid = (pl.cdiv(rows, tile_r),)  # partial last block handled by Pallas

    # Only alias when the pad materialised a fresh buffer; aliasing the
    # caller's (non-donated) array would force a defensive full copy.
    alias = {0: 0} if padded else {}

    out2d = pl.pallas_call(
        linear_kernel,
        out_shape=jax.ShapeDtypeStruct((rows, LANES), x.dtype),
        grid=grid,
        in_specs=[
            pl.BlockSpec((tile_r, LANES), lambda i: (i, 0)),        # x tile
            pl.BlockSpec(memory_space=pltpu.MemorySpace.SMEM),      # [w, b]
        ],
        out_specs=pl.BlockSpec((tile_r, LANES), lambda i: (i, 0)),
        input_output_aliases=alias,
        compiler_params=pltpu.CompilerParams(
            dimension_semantics=("parallel",),
        ),
    )(x2d, wb)

    out = out2d.reshape(-1)
    if padded:
        out = out[:total]
    return out.reshape(n, 1)


if __name__ == "__main__":
    key = jax.random.PRNGKey(0)
    k_w, k_b, k_x, k_x2, k_x3 = jax.random.split(key, 5)

    # nn.Linear(1, 1) default init: U(-1/sqrt(in_features), +1/sqrt(in)) = U(-1, 1)
    weight = jax.random.uniform(k_w, (1, 1), jnp.float32, minval=-1.0, maxval=1.0)
    bias = jax.random.uniform(k_b, (1,), jnp.float32, minval=-1.0, maxval=1.0)

    # 1) Small input consistent with the module: the original [[4.0]] sample
    #    plus a few random rows (N=4 -> ragged/padded path, single full block).
    x_small = jnp.concatenate(
        [jnp.array([[4.0]], dtype=jnp.float32),
         jax.random.normal(k_x, (3, 1), jnp.float32)],
        axis=0,
    )
    y_small = linear_forward(x_small, weight, bias)
    jax.block_until_ready(y_small)
    assert y_small.shape == (4, 1)
    assert jnp.allclose(y_small, x_small @ weight.T + bias, atol=1e-6, rtol=1e-6)

    # 2) Lane-aligned input (N=4096): no-pad / no-slice / no-alias fast path;
    #    rows=32 -> tile_r=16 -> grid=2 (pipelined, megacore-shardable on v7x).
    x_big = jax.random.normal(k_x2, (4096, 1), jnp.float32)
    y_big = linear_forward(x_big, weight, bias)
    jax.block_until_ready(y_big)
    assert jnp.allclose(y_big, x_big @ weight.T + bias, atol=1e-6, rtol=1e-6)

    # 3) Aligned N whose row count is not a multiple of the tile: rows=20,
    #    tile_r=8 -> grid=3 with a partial (4-row) last block.
    x_part = jax.random.normal(k_x3, (2560, 1), jnp.float32)
    y_part = linear_forward(x_part, weight, bias, tile_rows=8)
    jax.block_until_ready(y_part)
    assert jnp.allclose(y_part, x_part @ weight.T + bias, atol=1e-6, rtol=1e-6)

    print("KERNEL_OK")
</pallas_src>

<mosaic_0001>
module attributes {stable_mosaic.version = 11 : i64} {
  func.func @linear_kernel(%arg0: i32, %arg1: memref<1x128xf32, #tpu.memory_space<vmem>>, %arg2: memref<2xf32, #tpu.memory_space<smem>>, %arg3: memref<1x128xf32, #tpu.memory_space<vmem>>) attributes {dimension_semantics = [#tpu.dimension_semantics<parallel>], iteration_bounds = array<i64: 1>, scalar_prefetch = 0 : i64, scratch_operands = 0 : i64, tpu.core_type = #tpu.core_type<tc>, window_params = [{transform_indices = @transform_0, window_bounds = array<i64: 1, 128>}, {transform_indices = @transform_1, window_bounds = array<i64: 2>}, {transform_indices = @transform_2, window_bounds = array<i64: 1, 128>}]} {
    %c0 = arith.constant 0 : index
    %0 = memref.load %arg2[%c0] : memref<2xf32, #tpu.memory_space<smem>>
    %c1 = arith.constant 1 : index
    %1 = memref.load %arg2[%c1] : memref<2xf32, #tpu.memory_space<smem>>
    %c0_0 = arith.constant 0 : index
    %c0_1 = arith.constant 0 : index
    %2 = vector.load %arg1[%c0_0, %c0_1] : memref<1x128xf32, #tpu.memory_space<vmem>>, vector<1x128xf32>
    %3 = vector.broadcast %0 : f32 to vector<1x128xf32>
    %4 = arith.mulf %2, %3 : vector<1x128xf32>
    %5 = vector.broadcast %1 : f32 to vector<1x128xf32>
    %6 = arith.addf %4, %5 : vector<1x128xf32>
    %c0_2 = arith.constant 0 : index
    %c0_3 = arith.constant 0 : index
    %7 = vector.load %arg3[%c0_2, %c0_3] : memref<1x128xf32, #tpu.memory_space<vmem>>, vector<1x128xf32>
    tpu.vector_store %arg3[%c0_2, %c0_3], %6 {strides = array<i32>} : memref<1x128xf32, #tpu.memory_space<vmem>>, vector<1x128xf32>,
    return
  }
  func.func @transform_0(%arg0: i32) -> (i32, i32) {
    %c0_i32 = arith.constant 0 : i32
    %c0_i32_0 = arith.constant 0 : i32
    return %arg0, %c0_i32 : i32, i32
  }
  func.func @transform_1(%arg0: i32) -> i32 {
    %c0_i32 = arith.constant 0 : i32
    %c0_i32_0 = arith.constant 0 : i32
    return %c0_i32 : i32
  }
  func.func @transform_2(%arg0: i32) -> (i32, i32) {
    %c0_i32 = arith.constant 0 : i32
    %c0_i32_0 = arith.constant 0 : i32
    return %arg0, %c0_i32 : i32, i32
  }
}

</mosaic_0001>

<llo_original>
// kernel: linear_forward.1
$region0: #{linear_forward.1}
  #allocation0 [shape = 'u32[]', space=smem, size = 0x4, offset = 0x4, fixed_abs, tag = 'smem constant byte address 0x4 - core index']
  #allocation1 [shape = 'u32[144,128]{1,0:T(1,128)}', space=vmem, size = 0x12000, scoped, tag = 'internal scratch']
  %s0 = inlined_call_operand.vmem [shape: f32[1,128], index: 0, kind: input, shape index: {}, may-alias: {0,2}]
  %s1 = inlined_call_operand.vmem [shape: f32[2], index: 1, kind: input, shape index: {}]
  %s2 = inlined_call_operand.vmem [shape: f32[1,128], index: 2, kind: output, shape index: {}, may-alias: {0,2}]
  %s3 = sld [smem:[#allocation0]]
  $region22: #{linear_forward.1} parent=0
    _
  %s5 = ssub.s32 1, %s3
  %s6 = scalar_select 0, %s5, %s3
  $region1: #{linear_forward.1} parent=0
    #allocation2 [shape = 'u8[512]{0}', space=smem, size = 0x200, scoped, tag = 'input window, operand 1, single buffered']
    #allocation3 [shape = 's32[1]{0}', space=sflag, size = 0x4, scoped, tag = 'scoped memory for linear_forward.1']
    %7 = vsyncpa [#allocation3], 0
    // Predicated region
    $region2: #{linear_forward.1} parent=1 // pred_check
      _
    $region3: #{linear_forward.1} parent=1 // pred_check_branch
      %9 = sbr.rel (0) target = $region5
    $region4: #{linear_forward.1} parent=1 // pred_region
      _
    $region5: #{linear_forward.1} parent=1 // pred_fallthru
      _
    // Predicated region
    $region6: #{linear_forward.1} parent=1 // pred_check
      _
    $region7: #{linear_forward.1} parent=1 // pred_check_branch
      %11 = sbr.rel (0) target = $region9
    $region8: #{linear_forward.1} parent=1 // pred_region
      %s13 = ssub.s32 16, 16
      %14 = vsyncadd [#allocation3], %s13
      %s16 = sshll.u32 %s1, 4
      %s17 = int_to_ptr.vmem [resolvable:$true] %s16
      %19 = dma.vmem_to_smem %s17, 16, [#allocation2], [#allocation3]
    $region9: #{linear_forward.1} parent=1 // pred_fallthru
      _
    // Predicated region
    $region10: #{linear_forward.1} parent=1 // pred_check
      _
    $region11: #{linear_forward.1} parent=1 // pred_check_branch
      %21 = sbr.rel (0) target = $region13
    $region12: #{linear_forward.1} parent=1 // pred_region
      %22 = dma.done [#allocation3], 16
    $region13: #{linear_forward.1} parent=1 // pred_fallthru
      _
    %23 = sfence
    %s24 = sld [smem:[#allocation2]]
    %s25 = sld [smem:[#allocation2 + $0x1]]
    %v26 = vld [vmem:[%s0] sm:$0x1]
    %v27 = vstv %s24
    %v28 = vmul.f32 %v26, %v27
    %v29 = vstv %s25
    %v30 = vadd.f32 %v28, %v29
    %31 = vst [vmem:[%s2] sm:$0x1] %v30
    // Predicated region
    $region14: #{linear_forward.1} parent=1 // pred_check
      _
    $region15: #{linear_forward.1} parent=1 // pred_check_branch
      %33 = sbr.rel (0) target = $region17
    $region16: #{linear_forward.1} parent=1 // pred_region
      _
    $region17: #{linear_forward.1} parent=1 // pred_fallthru
      _
    // Predicated region
    $region18: #{linear_forward.1} parent=1 // pred_check
      _
    $region19: #{linear_forward.1} parent=1 // pred_check_branch
      %35 = sbr.rel (0) target = $region21
    $region20: #{linear_forward.1} parent=1 // pred_region
      _
    $region21: #{linear_forward.1} parent=1 // pred_fallthru
      _
    %36 = vsyncpa [#allocation3], 1

</llo_original>
